<compile_context>
chip_gen: v7x
topology: tpu7x:2x2x1
jax: 0.10.0
libtpu: 0.0.40
codegen_flags: <defaults>
</compile_context>

<pallas_src>
import jax
import jax.numpy as jnp
from jax.experimental import pallas as pl
from jax.experimental.pallas import tpu as pltpu


def _round_up(x: int, m: int) -> int:
    return ((x + m - 1) // m) * m


def head_kernel(x_ref, w_ref, b_ref, o_ref):
    # x_ref: (tile_n, dim_in)            -- native dtype (f32 or bf16)
    # w_ref: (dim_in, C_pad)             -- pre-transposed, lane-dense class axis
    # b_ref: (1, C_pad) f32              -- padded classes carry -inf
    # o_ref: (tile_n, C_pad)
    # MXU matmul with f32 accumulation; no operand upcast, no in-kernel transpose.
    logits = jnp.dot(x_ref[...], w_ref[...], preferred_element_type=jnp.float32)
    logits = logits + b_ref[...]

    # Softmax over the class (lane) axis == dim=1 of the 2-D output, in f32.
    m = jnp.max(logits, axis=-1, keepdims=True)
    e = jnp.exp(logits - m)                      # padded classes: exp(-inf) == 0
    denom = jnp.sum(e, axis=-1, keepdims=True)
    inv = pl.reciprocal(denom, approx=True)      # EUP vrcp, off the VALU critical path
    o_ref[...] = (e * inv).astype(o_ref.dtype)


def transformer_basic_head(x, weight, bias, *, tile_n=None):
    """x: (N, dim_in); weight: (num_classes, dim_in); bias: (num_classes,)."""
    N, dim_in = x.shape
    num_classes = weight.shape[0]

    # --- lane-dense class axis -------------------------------------------------
    c_pad = _round_up(num_classes, 128)
    # Pre-transpose once in the wrapper (layout plumbing, done outside the kernel):
    # padded weight columns are 0, padded bias entries are -inf so exp() == 0 there.
    w_t = jnp.zeros((dim_in, c_pad), dtype=weight.dtype)
    w_t = w_t.at[:, :num_classes].set(weight.T)
    b_pad = jnp.full((1, c_pad), -jnp.inf, dtype=jnp.float32)
    b_pad = b_pad.at[0, :num_classes].set(bias.astype(jnp.float32))

    # --- batch tiling ----------------------------------------------------------
    if tile_n is None:
        # Multiple of 8 sublanes, capped at 256 rows (keeps
        # 2*x_tile + 2*out_tile + 2*weight comfortably inside scoped VMEM, incl. v7x).
        tile_n = min(_round_up(N, 8), 256)
    tile_n = _round_up(tile_n, 8)
    n_pad = _round_up(N, tile_n)
    if n_pad != N:
        x = jnp.pad(x, ((0, n_pad - N), (0, 0)))   # padded rows are sliced off below

    grid = (n_pad // tile_n,)

    out = pl.pallas_call(
        head_kernel,
        out_shape=jax.ShapeDtypeStruct((n_pad, c_pad), x.dtype),
        grid_spec=pltpu.PrefetchScalarGridSpec(
            num_scalar_prefetch=0,
            grid=grid,
            in_specs=[
                pl.BlockSpec((tile_n, dim_in), lambda i: (i, 0)),
                pl.BlockSpec((dim_in, c_pad), lambda i: (0, 0)),   # resident weight
                pl.BlockSpec((1, c_pad), lambda i: (0, 0)),        # resident bias
            ],
            out_specs=pl.BlockSpec((tile_n, c_pad), lambda i: (i, 0)),
        ),
        compiler_params=pltpu.CompilerParams(
            dimension_semantics=("parallel",),   # batch axis shards across TCs on v7x
        ),
    )(x, w_t, b_pad)

    # Slice back to the true batch and class extents.
    return out[:N, :num_classes]


def _reference(x, weight, bias):
    return jax.nn.softmax(x.astype(jnp.float32) @ weight.T.astype(jnp.float32)
                          + bias.astype(jnp.float32), axis=1).astype(x.dtype)


if __name__ == "__main__":
    key = jax.random.PRNGKey(0)

    # ---- check 1: shapes consistent with the module's forward (N, dim_in) ----
    N, dim_in, num_classes = 8, 32, 16
    kx, kw, kb, k2 = jax.random.split(key, 4)
    x = jax.random.normal(kx, (N, dim_in), dtype=jnp.float32)
    bound = 1.0 / (dim_in ** 0.5)  # nn.Linear default init range
    weight = jax.random.uniform(kw, (num_classes, dim_in), jnp.float32, -bound, bound)
    bias = jax.random.uniform(kb, (num_classes,), jnp.float32, -bound, bound)

    out = jax.block_until_ready(transformer_basic_head(x, weight, bias))
    ref = _reference(x, weight, bias)
    assert out.shape == (N, num_classes)
    assert jnp.allclose(out, ref, atol=2e-3, rtol=2e-3)  # approx reciprocal tolerance
    assert jnp.allclose(jnp.sum(out, axis=1), 1.0, atol=2e-3)

    # ---- check 2: ragged batch + non-128 classes + multi-step grid ----
    N2, dim2, nc2 = 20, 64, 10
    kx2, kw2, kb2 = jax.random.split(k2, 3)
    x2 = jax.random.normal(kx2, (N2, dim2), dtype=jnp.float32)
    b2 = 1.0 / (dim2 ** 0.5)
    w2 = jax.random.uniform(kw2, (nc2, dim2), jnp.float32, -b2, b2)
    bi2 = jax.random.uniform(kb2, (nc2,), jnp.float32, -b2, b2)

    out2 = jax.block_until_ready(transformer_basic_head(x2, w2, bi2, tile_n=8))
    ref2 = _reference(x2, w2, bi2)
    assert out2.shape == (N2, nc2)
    assert jnp.allclose(out2, ref2, atol=2e-3, rtol=2e-3)

    print("KERNEL_OK")
</pallas_src>

<mosaic_0001>
module attributes {stable_mosaic.version = 11 : i64} {
  func.func @head_kernel(%arg0: i32, %arg1: memref<8x32xf32, #tpu.memory_space<vmem>>, %arg2: memref<32x128xf32, #tpu.memory_space<vmem>>, %arg3: memref<1x128xf32, #tpu.memory_space<vmem>>, %arg4: memref<8x128xf32, #tpu.memory_space<vmem>>) attributes {dimension_semantics = [#tpu.dimension_semantics<parallel>], iteration_bounds = array<i64: 1>, scalar_prefetch = 0 : i64, scratch_operands = 0 : i64, tpu.core_type = #tpu.core_type<tc>, window_params = [{transform_indices = @transform_0, window_bounds = array<i64: 8, 32>}, {pipeline_mode = #tpu.pipeline_mode<synchronous>, transform_indices = @transform_1, window_bounds = array<i64: 32, 128>}, {pipeline_mode = #tpu.pipeline_mode<synchronous>, transform_indices = @transform_2, window_bounds = array<i64: 1, 128>}, {transform_indices = @transform_3, window_bounds = array<i64: 8, 128>}]} {
    %c0 = arith.constant 0 : index
    %c0_0 = arith.constant 0 : index
    %0 = vector.load %arg1[%c0, %c0_0] : memref<8x32xf32, #tpu.memory_space<vmem>>, vector<8x32xf32>
    %c0_1 = arith.constant 0 : index
    %c0_2 = arith.constant 0 : index
    %1 = vector.load %arg2[%c0_1, %c0_2] : memref<32x128xf32, #tpu.memory_space<vmem>>, vector<32x128xf32>
    %cst = arith.constant dense<0.000000e+00> : vector<8x128xf32>
    %2 = tpu.matmul %0, %1, %cst {dimension_numbers = #tpu.dot_dimension_numbers<[1], [0], [0], [1], [0, 0, 1, 1], [], []>} : vector<8x32xf32>, vector<32x128xf32>, vector<8x128xf32> -> vector<8x128xf32>
    %c0_3 = arith.constant 0 : index
    %c0_4 = arith.constant 0 : index
    %3 = vector.load %arg3[%c0_3, %c0_4] : memref<1x128xf32, #tpu.memory_space<vmem>>, vector<1x128xf32>
    %4 = vector.broadcast %3 : vector<1x128xf32> to vector<8x128xf32>
    %5 = arith.addf %2, %4 : vector<8x128xf32>
    %cst_5 = arith.constant dense<0xFF800000> : vector<8xf32>
    %6 = vector.multi_reduction <maximumf>, %5, %cst_5 [1] : vector<8x128xf32> to vector<8xf32>
    %7 = vector.shape_cast %6 : vector<8xf32> to vector<8x1xf32>
    %8 = vector.broadcast %7 : vector<8x1xf32> to vector<8x128xf32>
    %9 = arith.subf %5, %8 : vector<8x128xf32>
    %10 = math.exp %9 : vector<8x128xf32>
    %cst_6 = arith.constant dense<0.000000e+00> : vector<8xf32>
    %11 = vector.multi_reduction <add>, %10, %cst_6 [1] : vector<8x128xf32> to vector<8xf32>
    %12 = vector.shape_cast %11 : vector<8xf32> to vector<8x1xf32>
    %13 = tpu.reciprocal %12 {approx = true} : vector<8x1xf32> -> vector<8x1xf32>
    %14 = vector.broadcast %13 : vector<8x1xf32> to vector<8x128xf32>
    %15 = arith.mulf %10, %14 : vector<8x128xf32>
    %c0_7 = arith.constant 0 : index
    %c0_8 = arith.constant 0 : index
    %16 = vector.load %arg4[%c0_7, %c0_8] : memref<8x128xf32, #tpu.memory_space<vmem>>, vector<8x128xf32>
    tpu.vector_store %arg4[%c0_7, %c0_8], %15 {strides = array<i32>} : memref<8x128xf32, #tpu.memory_space<vmem>>, vector<8x128xf32>,
    return
  }
  func.func @transform_0(%arg0: i32) -> (i32, i32) {
    %c0_i32 = arith.constant 0 : i32
    %c0_i32_0 = arith.constant 0 : i32
    return %arg0, %c0_i32 : i32, i32
  }
  func.func @transform_1(%arg0: i32) -> (i32, i32) {
    %c0_i32 = arith.constant 0 : i32
    %c0_i32_0 = arith.constant 0 : i32
    %c0_i32_1 = arith.constant 0 : i32
    return %c0_i32, %c0_i32_0 : i32, i32
  }
  func.func @transform_2(%arg0: i32) -> (i32, i32) {
    %c0_i32 = arith.constant 0 : i32
    %c0_i32_0 = arith.constant 0 : i32
    %c0_i32_1 = arith.constant 0 : i32
    return %c0_i32, %c0_i32_0 : i32, i32
  }
  func.func @transform_3(%arg0: i32) -> (i32, i32) {
    %c0_i32 = arith.constant 0 : i32
    %c0_i32_0 = arith.constant 0 : i32
    return %arg0, %c0_i32 : i32, i32
  }
}

</mosaic_0001>

<llo_original>
// kernel: tpu_custom_call.1
$region0: #{tpu_custom_call.1}
  #allocation0 [shape = 'u32[]', space=smem, size = 0x4, offset = 0x4, fixed_abs, tag = 'smem constant byte address 0x4 - core index']
  #allocation1 [shape = 'u32[144,128]{1,0:T(1,128)}', space=vmem, size = 0x12000, scoped, tag = 'internal scratch']
  %s0 = inlined_call_operand.hbm [shape: f32[8,32], index: 0, kind: input, shape index: {}]
  %s1 = inlined_call_operand.hbm [shape: f32[32,128], index: 1, kind: input, shape index: {}]
  %s2 = inlined_call_operand.vmem [shape: f32[1,128], index: 2, kind: input, shape index: {}]
  %s3 = inlined_call_operand.hbm [shape: f32[8,128], index: 3, kind: output, shape index: {}]
  %s4 = sld [smem:[#allocation0]]
  $region30: #{tpu_custom_call.1} parent=0
    _
  %s6 = ssub.s32 1, %s4
  %s7 = scalar_select 0, %s6, %s4
  $region1: #{tpu_custom_call.1} parent=0
    #allocation2 [shape = 'u8[4096]{0}', space=vmem, size = 0x1000, scoped, tag = 'input window, operand 0, single buffered']
    #allocation3 [shape = 's32[1]{0}', space=sflag, size = 0x4, scoped, tag = 'scoped memory for tpu_custom_call.1']
    #allocation4 [shape = 's32[1]{0}', space=sflag, size = 0x4, scoped, tag = 'scoped memory for tpu_custom_call.1']
    #allocation5 [shape = 'u8[16384]{0}', space=vmem, size = 0x4000, scoped, tag = 'input window, operand 1, single buffered']
    #allocation6 [shape = 's32[1]{0}', space=sflag, size = 0x4, scoped, tag = 'scoped memory for tpu_custom_call.1']
    #allocation7 [shape = 'u8[4096]{0}', space=vmem, size = 0x1000, scoped, tag = 'output window, operand 0, single buffered']
    %8 = vsyncpa [#allocation3], 0
    %9 = vsyncpa [#allocation6], 0
    %10 = vsyncpa [#allocation4], 0
    // Predicated region
    $region2: #{tpu_custom_call.1} parent=1 // pred_check
      _
    $region3: #{tpu_custom_call.1} parent=1 // pred_check_branch
      %12 = sbr.rel (0) target = $region5
    $region4: #{tpu_custom_call.1} parent=1 // pred_region
      %s14 = ssub.s32 128, 128
      %15 = vsyncadd [#allocation3], %s14
      %s17 = sshll.u32 [#allocation2], 4
      %s18 = int_to_ptr.vmem [resolvable:$true] %s17
      %20 = dma.hbm_to_vmem [thread:$0]  %s0, 128, %s18, [#allocation3]
    $region5: #{tpu_custom_call.1} parent=1 // pred_fallthru
      _
    // Predicated region
    $region6: #{tpu_custom_call.1} parent=1 // pred_check
      _
    $region7: #{tpu_custom_call.1} parent=1 // pred_check_branch
      %22 = sbr.rel (0) target = $region9
    $region8: #{tpu_custom_call.1} parent=1 // pred_region
      %s24 = ssub.s32 512, 512
      %25 = vsyncadd [#allocation6], %s24
      %s26 = sshll.u32 [#allocation5], 4
      %s27 = int_to_ptr.vmem [resolvable:$true] %s26
      %32 = dma.hbm_to_vmem [thread:$0]  %s1, 512, %s27, [#allocation6], 128, 128, 8
    $region9: #{tpu_custom_call.1} parent=1 // pred_fallthru
      _
    // Predicated region
    $region10: #{tpu_custom_call.1} parent=1 // pred_check
      _
    $region11: #{tpu_custom_call.1} parent=1 // pred_check_branch
      %34 = sbr.rel (0) target = $region13
    $region12: #{tpu_custom_call.1} parent=1 // pred_region
      _
    $region13: #{tpu_custom_call.1} parent=1 // pred_fallthru
      _
    // Predicated region
    $region14: #{tpu_custom_call.1} parent=1 // pred_check
      _
    $region15: #{tpu_custom_call.1} parent=1 // pred_check_branch
      %36 = sbr.rel (0) target = $region17
    $region16: #{tpu_custom_call.1} parent=1 // pred_region
      %37 = dma.done [#allocation3], 128
    $region17: #{tpu_custom_call.1} parent=1 // pred_fallthru
      _
    // Predicated region
    $region18: #{tpu_custom_call.1} parent=1 // pred_check
      _
    $region19: #{tpu_custom_call.1} parent=1 // pred_check_branch
      %39 = sbr.rel (0) target = $region21
    $region20: #{tpu_custom_call.1} parent=1 // pred_region
      %40 = dma.done [#allocation6], 512
    $region21: #{tpu_custom_call.1} parent=1 // pred_fallthru
      _
    %v41 = vld [vmem:[#allocation2] sm:$0xff]
    %v42 = vld [vmem:[#allocation5] sm:$0xff]
    %v43 = vld [vmem:[#allocation5 + $0x8] sm:$0xff]
    %v44 = vld [vmem:[#allocation5 + $0x10] sm:$0xff]
    %v45 = vld [vmem:[#allocation5 + $0x18] sm:$0xff]
    %v46 = vld [vmem:[%s2] sm:$0x1]
    %v48 = vlaneseq
    %v49 = vshrl.u32 %v48, 7
    %v50 = vsub.s32 0, %v49
    %v51 = vrot.slane %v46, %v50
    %vm53 = vcmask 261120
    %v55 = vsel %vm53, %v41, 0
    %57 = vmatprep.subr.mxu0 0.0
    %58 = vmatpush1.msra.mxu0 %v42
    %59 = vmatprep.subr.mxu0 0.0
    %60 = vmatpush1.msra.mxu0 %v43
    %61 = vmatprep.subr.mxu0 0.0
    %62 = vmatpush1.msra.mxu0 %v44
    %63 = vmatprep.subr.mxu0 0.0
    %64 = vmatpush1.msra.mxu0 %v45
    %65 = vmatprep.subr.mxu0 0.0
    %66 = vmatpush1.msra.mxu0 0.0
    %67 = vmatprep.subr.mxu0 0.0
    %68 = vmatpush1.msra.mxu0 0.0
    %69 = vmatprep.subr.mxu0 0.0
    %70 = vmatpush1.msra.mxu0 0.0
    %71 = vmatprep.subr.mxu0 0.0
    %72 = vmatpush1.msra.mxu0 0.0
    %73 = vmatprep.subr.mxu0 0.0
    %74 = vmatpush1.msra.mxu0 0.0
    %75 = vmatprep.subr.mxu0 0.0
    %76 = vmatpush1.msra.mxu0 0.0
    %77 = vmatprep.subr.mxu0 0.0
    %78 = vmatpush1.msra.mxu0 0.0
    %79 = vmatprep.subr.mxu0 0.0
    %80 = vmatpush1.msra.mxu0 0.0
    %81 = vmatprep.subr.mxu0 0.0
    %82 = vmatpush1.msra.mxu0 0.0
    %83 = vmatprep.subr.mxu0 0.0
    %84 = vmatpush1.msra.mxu0 0.0
    %85 = vmatprep.subr.mxu0 0.0
    %86 = vmatpush1.msra.mxu0 0.0
    %87 = vmatprep.subr.mxu0 0.0
    %88 = vmatpush1.msra.mxu0 0.0
    %89 = vmatprep.subr.mxu0 0.0
    %90 = vmatpush1.msra.mxu0 0.0
    %91 = vmatprep.subr.mxu0 0.0
    %92 = vmatpush1.msra.mxu0 0.0
    %93 = vmatprep.subr.mxu0 0.0
    %94 = vmatpush1.msra.mxu0 0.0
    %95 = vmatprep.subr.mxu0 0.0
    %96 = vmatpush1.msra.mxu0 0.0
    %97 = vmatprep.subr.mxu0 0.0
    %98 = vmatpush1.msra.mxu0 0.0
    %99 = vmatprep.subr.mxu0 0.0
    %100 = vmatpush1.msra.mxu0 0.0
    %101 = vmatprep.subr.mxu0 0.0
    %102 = vmatpush1.msra.mxu0 0.0
    %103 = vmatprep.subr.mxu0 0.0
    %104 = vmatpush1.msra.mxu0 0.0
    %105 = vmatprep.subr.mxu0 0.0
    %106 = vmatpush1.msra.mxu0 0.0
    %107 = vmatprep.subr.mxu0 0.0
    %108 = vmatpush1.msra.mxu0 0.0
    %109 = vmatprep.subr.mxu0 0.0
    %110 = vmatpush1.msra.mxu0 0.0
    %111 = vmatprep.subr.mxu0 0.0
    %112 = vmatpush1.msra.mxu0 0.0
    %113 = vmatprep.subr.mxu0 0.0
    %114 = vmatpush1.msra.mxu0 0.0
    %115 = vmatprep.subr.mxu0 0.0
    %116 = vmatpush1.msra.mxu0 0.0
    %117 = vmatprep.subr.mxu0 0.0
    %118 = vmatpush1.msra.mxu0 0.0
    %119 = vmatprep.subr.mxu0 0.0
    %120 = vmatpush1.msra.mxu0 0.0
    %121 = vmatprep.mubr.f32.mxu0 0.0
    %122 = vmatmul.mubr.f32.gmra.mrb[0].mxu0 %v55
    %v123 = vpop.f32.mrb[0].mxu0
    %v124 = vadd.f32 %v51, %v123
    %v125 = vpop.f32.mrb[0].mxu0
    %126 = vdwg.mxu0
    %127 = vmax.xlane.f32.xlu0 %v124
    %v128 = vpop.xlane.xlu0 %127
    %v129 = vsub.f32 %v124, %v128
    %v130 = vmul.f32 %v129, 1.442695
    %v131 = vpow.pop %v130
    %132 = vadd.xlane.f32.xlu0 %v131
    %v133 = vpop.xlane.xlu0 %132
    %v134 = vrcp.pop %v133
    %v135 = vmul.f32 %v131, %v134
    %136 = vst [vmem:[#allocation7] sm:$0xff] %v135
    // Predicated region
    $region22: #{tpu_custom_call.1} parent=1 // pred_check
      _
    $region23: #{tpu_custom_call.1} parent=1 // pred_check_branch
      %138 = sbr.rel (0) target = $region25
    $region24: #{tpu_custom_call.1} parent=1 // pred_region
      %s140 = ssub.s32 128, 128
      %141 = vsyncadd [#allocation4], %s140
      %s143 = sshll.u32 [#allocation7], 4
      %s144 = int_to_ptr.vmem [resolvable:$true] %s143
      %146 = dma.vmem_to_hbm [thread:$0]  %s144, 128, %s3, [#allocation4]
    $region25: #{tpu_custom_call.1} parent=1 // pred_fallthru
      _
    // Predicated region
    $region26: #{tpu_custom_call.1} parent=1 // pred_check
      _
    $region27: #{tpu_custom_call.1} parent=1 // pred_check_branch
      %148 = sbr.rel (0) target = $region29
    $region28: #{tpu_custom_call.1} parent=1 // pred_region
      %149 = dma.done [#allocation4], 128
    $region29: #{tpu_custom_call.1} parent=1 // pred_fallthru
      _
    %150 = vsyncpa [#allocation3], 1
    %151 = vsyncpa [#allocation6], 1
    %152 = vsyncpa [#allocation4], 1

</llo_original>
